<compile_context>
chip_gen: v6e
topology: v6e:2x2x1
jax: 0.10.0
libtpu: 0.0.40
codegen_flags: <defaults>
</compile_context>

<pallas_src>
import functools

import jax
import jax.numpy as jnp
from jax.experimental import pallas as pl
from jax.experimental.pallas import tpu as pltpu


# ---------------------------------------------------------------------------
# kernels
# ---------------------------------------------------------------------------

def _fused_mlp_gate(pooled, w1, b1, w2, b2):
    """pooled: (C, 2) = [avg | max] columns.  Returns sigmoid gate (C, 1)."""
    h = jnp.dot(w1, pooled, preferred_element_type=jnp.float32) + b1     # (mid, 2)
    h = jnp.maximum(h, 0.0)
    y = jnp.dot(w2, h, preferred_element_type=jnp.float32) + b2          # (C, 2)
    att = jnp.sum(y, axis=-1, keepdims=True)                             # (C, 1)
    return jax.nn.sigmoid(att)


def _stack_pooled(avg, mx):
    """Build the (C, 2) pooled matrix from two (C, 1) columns via broadcast+select
    (avoids a width-1 lane concatenate)."""
    c = avg.shape[0]
    col = jax.lax.broadcasted_iota(jnp.int32, (c, 2), 1)
    return jnp.where(col == 0, avg, mx)


def _fused_kernel(x_ref, w1_ref, b1_ref, w2_ref, b2_ref, o_ref, *, inv_hw):
    # x_ref block: (C, HW) -- full extent, so HW need not be 128-aligned.
    x = x_ref[...]                                                        # native dtype
    mx = jnp.max(x, axis=-1, keepdims=True).astype(jnp.float32)          # exact in any dtype
    s = jnp.sum(x.astype(jnp.float32), axis=-1, keepdims=True)           # f32 accumulate
    scale = _fused_mlp_gate(_stack_pooled(s * inv_hw, mx),
                            w1_ref[...], b1_ref[...], w2_ref[...], b2_ref[...])
    o_ref[...] = (x * scale.astype(x.dtype)).astype(o_ref.dtype)


def _pool_kernel(x_ref, sum_ref, max_ref):
    # x_ref block: (1, c_tile, HW); outputs: (1, c_tile, 1) each.
    x = x_ref[...]
    max_ref[...] = jnp.max(x, axis=-1, keepdims=True).astype(jnp.float32)
    sum_ref[...] = jnp.sum(x.astype(jnp.float32), axis=-1, keepdims=True)


def _apply_kernel(scale_ref, x_ref, o_ref):
    # scale_ref: (1, c_tile, 1) already in x.dtype; x_ref/o_ref: (1, c_tile, HW)
    o_ref[...] = (x_ref[...] * scale_ref[...]).astype(o_ref.dtype)


# ---------------------------------------------------------------------------
# hardware / tiling helpers
# ---------------------------------------------------------------------------

def _vmem_usable_bytes():
    """Chip VMEM capacity minus 16 MiB headroom (Mosaic scratch, semaphores,
    pipeline buffers)."""
    try:
        cap = int(pltpu.get_tpu_info().vmem_capacity_bytes)
    except Exception:
        cap = 64 << 20   # conservative (v7x per-TC)
    return max(16 << 20, cap - (16 << 20))


def _is_v5e():
    try:
        kind = jax.devices()[0].device_kind.lower()
    except Exception:
        return False
    return ("v5 lite" in kind) or ("v5e" in kind) or ("v5litepod" in kind)


def _pick_c_tile(C, row_bytes, budget_bytes):
    """Largest c_tile that divides C, is a multiple of 8 (or equals C), and keeps
    (c_tile, HW) under budget.  Always returns a divisor of C."""
    if C * row_bytes <= budget_bytes:
        return C
    best = 0
    t = 8
    while t < C:
        if C % t == 0 and t * row_bytes <= budget_bytes:
            best = t
        t += 8
    if best:
        return best
    return 8 if C % 8 == 0 else C   # last resort; vmem_limit grows to cover it


def _streamed_spec(block_shape, index_map, depth=3):
    """BlockSpec with deeper multi-buffering for the streaming x blocks; falls back
    to default double-buffering if this Pallas build lacks pipeline_mode."""
    buffered = getattr(pl, "Buffered", None)
    if buffered is None:
        return pl.BlockSpec(block_shape, index_map)
    try:
        return pl.BlockSpec(block_shape, index_map, pipeline_mode=buffered(depth))
    except TypeError:
        return pl.BlockSpec(block_shape, index_map)


# ---------------------------------------------------------------------------
# wrapper
# ---------------------------------------------------------------------------

@functools.partial(jax.jit,
                   static_argnames=("max_fused_bytes", "stream_block_bytes", "donate_x"))
def channel_gate(x, w1, b1, w2, b2, *, max_fused_bytes=None,
                 stream_block_bytes=None, donate_x=False):
    """x: (B, C, H, W).  Weights in PyTorch nn.Linear layout:
       w1: (mid, C), b1: (mid,), w2: (C, mid), b2: (C,)."""
    B, C, H, W = x.shape
    HW = H * W
    mid = w1.shape[0]
    itemsize = x.dtype.itemsize
    inv_hw = 1.0 / float(HW)

    usable = _vmem_usable_bytes()
    fused_budget = usable // 6                       # ~8 MiB v7x, ~18 MiB v6e
    if _is_v5e():
        fused_budget = min(fused_budget, 16 << 20)   # conservative on v5e
    if max_fused_bytes is not None:
        fused_budget = int(max_fused_bytes)

    x_flat = x.reshape(B, C, HW)
    slab_bytes = C * HW * itemsize

    if slab_bytes <= fused_budget:
        # ---------------- fused single pass: pool + MLP + scale ----------------
        w1f = w1.astype(jnp.float32)
        b1c = b1.astype(jnp.float32).reshape(mid, 1)
        w2f = w2.astype(jnp.float32)
        b2c = b2.astype(jnp.float32).reshape(C, 1)
        vmem_limit = int(min(usable, max(6 * slab_bytes + (4 << 20), 24 << 20)))

        out_flat = pl.pallas_call(
            functools.partial(_fused_kernel, inv_hw=inv_hw),
            out_shape=jax.ShapeDtypeStruct((B, C, HW), x.dtype),
            grid_spec=pltpu.PrefetchScalarGridSpec(
                num_scalar_prefetch=0,
                grid=(B,),
                in_specs=[
                    pl.BlockSpec((pl.Squeezed(), C, HW), lambda b: (b, 0, 0)),
                    pl.BlockSpec((mid, C), lambda b: (0, 0)),
                    pl.BlockSpec((mid, 1), lambda b: (0, 0)),
                    pl.BlockSpec((C, mid), lambda b: (0, 0)),
                    pl.BlockSpec((C, 1), lambda b: (0, 0)),
                ],
                out_specs=pl.BlockSpec((pl.Squeezed(), C, HW), lambda b: (b, 0, 0)),
            ),
            compiler_params=pltpu.CompilerParams(
                dimension_semantics=("parallel",),
                vmem_limit_bytes=vmem_limit),
            input_output_aliases=({0: 0} if donate_x else {}),
            cost_estimate=pl.CostEstimate(
                flops=int(4 * B * C * HW + 8 * B * mid * C),
                transcendentals=int(B * C),
                bytes_accessed=int(2 * B * C * HW * itemsize)),
        )(x_flat, w1f, b1c, w2f, b2c)
        return out_flat.reshape(B, C, H, W)

    # ---------------- two-pass path: tile over C, full-HW blocks ----------------
    row_bytes = HW * itemsize
    stream_budget = (int(stream_block_bytes) if stream_block_bytes is not None
                     else min(4 << 20, usable // 8))
    c_tile = _pick_c_tile(C, row_bytes, stream_budget)
    n_c = C // c_tile
    block_bytes = c_tile * row_bytes
    vmem_limit = int(min(usable, max(8 * block_bytes + (4 << 20), 24 << 20)))

    # pass A: pooled sum & max per channel (reads x once).
    pooled_sum, pooled_max = pl.pallas_call(
        _pool_kernel,
        out_shape=(jax.ShapeDtypeStruct((B, C, 1), jnp.float32),
                   jax.ShapeDtypeStruct((B, C, 1), jnp.float32)),
        grid_spec=pltpu.PrefetchScalarGridSpec(
            num_scalar_prefetch=0,
            grid=(B, n_c),
            in_specs=[
                _streamed_spec((1, c_tile, HW), lambda b, c: (b, c, 0)),
            ],
            out_specs=(pl.BlockSpec((1, c_tile, 1), lambda b, c: (b, c, 0)),
                       pl.BlockSpec((1, c_tile, 1), lambda b, c: (b, c, 0))),
        ),
        compiler_params=pltpu.CompilerParams(
            dimension_semantics=("parallel", "parallel"),
            vmem_limit_bytes=vmem_limit),
        cost_estimate=pl.CostEstimate(
            flops=int(2 * B * C * HW),
            transcendentals=0,
            bytes_accessed=int(B * C * HW * itemsize)),
    )(x_flat)

    # tiny shared MLP + sigmoid in plain JAX (negligible flops).
    avg = pooled_sum[..., 0] * inv_hw                  # (B, C) f32
    mx = pooled_max[..., 0]                            # (B, C) f32
    w1f = w1.astype(jnp.float32)
    b1f = b1.astype(jnp.float32)
    w2f = w2.astype(jnp.float32)
    b2f = b2.astype(jnp.float32)

    def _mlp(v):
        return jnp.maximum(v @ w1f.T + b1f, 0.0) @ w2f.T + b2f

    scale = jax.nn.sigmoid(_mlp(avg) + _mlp(mx))       # (B, C); fc2 bias counted twice
    scale = scale.astype(x.dtype).reshape(B, C, 1)     # native-dtype gate for pass B

    # pass B: re-stream tiles, multiply by resident gate.
    out_flat = pl.pallas_call(
        _apply_kernel,
        out_shape=jax.ShapeDtypeStruct((B, C, HW), x.dtype),
        grid_spec=pltpu.PrefetchScalarGridSpec(
            num_scalar_prefetch=0,
            grid=(B, n_c),
            in_specs=[
                pl.BlockSpec((1, c_tile, 1), lambda b, c: (b, c, 0)),
                _streamed_spec((1, c_tile, HW), lambda b, c: (b, c, 0)),
            ],
            out_specs=pl.BlockSpec((1, c_tile, HW), lambda b, c: (b, c, 0)),
        ),
        compiler_params=pltpu.CompilerParams(
            dimension_semantics=("parallel", "parallel"),
            vmem_limit_bytes=vmem_limit),
        input_output_aliases=({1: 0} if donate_x else {}),
        cost_estimate=pl.CostEstimate(
            flops=int(B * C * HW),
            transcendentals=0,
            bytes_accessed=int(2 * B * C * HW * itemsize)),
    )(scale, x_flat)

    return out_flat.reshape(B, C, H, W)


# ---------------------------------------------------------------------------
# test
# ---------------------------------------------------------------------------

def _reference(x, w1, b1, w2, b2):
    # Pure-JAX mirror of the PyTorch forward (including the doubled fc2 bias).
    avg = jnp.mean(x, axis=(2, 3))                     # (B, C)
    mx = jnp.max(x, axis=(2, 3))                       # (B, C)

    def mlp(v):
        return jnp.maximum(v @ w1.T + b1, 0.0) @ w2.T + b2

    att = mlp(avg) + mlp(mx)
    scale = jax.nn.sigmoid(att)[:, :, None, None]
    return x * scale


def _make_case(key, B, C, H, W, reduction_ratio=16):
    mid = max(C // reduction_ratio, 1)
    kx, k1, k2, k3, k4 = jax.random.split(key, 5)
    x = jax.random.normal(kx, (B, C, H, W), dtype=jnp.float32)
    bound1 = 1.0 / jnp.sqrt(C)
    w1 = jax.random.uniform(k1, (mid, C), jnp.float32, -bound1, bound1)
    b1 = jax.random.uniform(k2, (mid,), jnp.float32, -bound1, bound1)
    bound2 = 1.0 / jnp.sqrt(mid)
    w2 = jax.random.uniform(k3, (C, mid), jnp.float32, -bound2, bound2)
    b2 = jax.random.uniform(k4, (C,), jnp.float32, -bound2, bound2)
    return x, w1, b1, w2, b2


if __name__ == "__main__":
    key = jax.random.PRNGKey(0)
    ka, kb, kc = jax.random.split(key, 3)

    # Case 1: small map -> fused single pass (grid=(B,)).
    args1 = _make_case(ka, B=2, C=64, H=16, W=16)
    out1 = jax.block_until_ready(channel_gate(*args1))
    ref1 = _reference(*args1)
    assert out1.shape == args1[0].shape
    assert jnp.allclose(out1, ref1, atol=1e-5, rtol=1e-5), "fused-pass mismatch"

    # Case 2: force the C-tiled two-pass path (pool pass + external MLP + apply pass).
    args2 = _make_case(kb, B=2, C=64, H=32, W=32)
    out2 = jax.block_until_ready(
        channel_gate(*args2, max_fused_bytes=1024, stream_block_bytes=64 * 1024))
    ref2 = _reference(*args2)
    assert out2.shape == args2[0].shape
    assert jnp.allclose(out2, ref2, atol=1e-5, rtol=1e-5), "two-pass mismatch"

    # Case 3: lane-sparse 7x7 spatial map (deep-CNN regime) -> fused path with
    # full-extent (C, 49) blocks; checks reductions over non-128-aligned lanes.
    args3 = _make_case(kc, B=1, C=256, H=7, W=7)
    out3 = jax.block_until_ready(channel_gate(*args3))
    ref3 = _reference(*args3)
    assert out3.shape == args3[0].shape
    assert jnp.allclose(out3, ref3, atol=1e-5, rtol=1e-5), "7x7 fused mismatch"

    print("KERNEL_OK")
</pallas_src>

<mosaic_0001>
module attributes {stable_mosaic.version = 11 : i64} {
  func.func @_fused_kernel(%arg0: i32, %arg1: memref<1x64x256xf32, #tpu.memory_space<vmem>>, %arg2: memref<4x64xf32, #tpu.memory_space<vmem>>, %arg3: memref<4x1xf32, #tpu.memory_space<vmem>>, %arg4: memref<64x4xf32, #tpu.memory_space<vmem>>, %arg5: memref<64x1xf32, #tpu.memory_space<vmem>>, %arg6: memref<1x64x256xf32, #tpu.memory_space<vmem>>) attributes {dimension_semantics = [#tpu.dimension_semantics<parallel>], iteration_bounds = array<i64: 2>, scalar_prefetch = 0 : i64, scratch_operands = 0 : i64, tpu.core_type = #tpu.core_type<tc>, window_params = [{transform_indices = @transform_0, window_bounds = array<i64: 1, 64, 256>}, {pipeline_mode = #tpu.pipeline_mode<synchronous>, transform_indices = @transform_1, window_bounds = array<i64: 4, 64>}, {pipeline_mode = #tpu.pipeline_mode<synchronous>, transform_indices = @transform_2, window_bounds = array<i64: 4, 1>}, {pipeline_mode = #tpu.pipeline_mode<synchronous>, transform_indices = @transform_3, window_bounds = array<i64: 64, 4>}, {pipeline_mode = #tpu.pipeline_mode<synchronous>, transform_indices = @transform_4, window_bounds = array<i64: 64, 1>}, {transform_indices = @transform_5, window_bounds = array<i64: 1, 64, 256>}]} {
    %c0 = arith.constant 0 : index
    %c0_0 = arith.constant 0 : index
    %c0_1 = arith.constant 0 : index
    %0 = vector.load %arg1[%c0, %c0_0, %c0_1] : memref<1x64x256xf32, #tpu.memory_space<vmem>>, vector<1x64x256xf32>
    %1 = vector.shape_cast %0 : vector<1x64x256xf32> to vector<64x256xf32>
    %cst = arith.constant dense<0xFF800000> : vector<64xf32>
    %2 = vector.multi_reduction <maximumf>, %1, %cst [1] : vector<64x256xf32> to vector<64xf32>
    %3 = vector.shape_cast %2 : vector<64xf32> to vector<64x1xf32>
    %cst_2 = arith.constant dense<0.000000e+00> : vector<64xf32>
    %4 = vector.multi_reduction <add>, %1, %cst_2 [1] : vector<64x256xf32> to vector<64xf32>
    %5 = vector.shape_cast %4 : vector<64xf32> to vector<64x1xf32>
    %cst_3 = arith.constant 3.906250e-03 : f32
    %6 = vector.broadcast %cst_3 : f32 to vector<64x1xf32>
    %7 = arith.mulf %5, %6 : vector<64x1xf32>
    %8 = tpu.iota {dimensions = array<i32: 1>} : vector<64x2xi32>
    %c0_i32 = arith.constant 0 : i32
    %9 = vector.broadcast %c0_i32 : i32 to vector<64x2xi32>
    %10 = arith.cmpi eq, %8, %9 : vector<64x2xi32>
    %11 = vector.shape_cast %7 : vector<64x1xf32> to vector<64x1xf32>
    %12 = vector.broadcast %11 : vector<64x1xf32> to vector<64x2xf32>
    %13 = vector.shape_cast %3 : vector<64x1xf32> to vector<64x1xf32>
    %14 = vector.broadcast %13 : vector<64x1xf32> to vector<64x2xf32>
    %15 = arith.select %10, %12, %14 : vector<64x2xi1>, vector<64x2xf32>
    %c0_4 = arith.constant 0 : index
    %c0_5 = arith.constant 0 : index
    %16 = vector.load %arg2[%c0_4, %c0_5] : memref<4x64xf32, #tpu.memory_space<vmem>>, vector<4x64xf32>
    %c0_6 = arith.constant 0 : index
    %c0_7 = arith.constant 0 : index
    %17 = vector.load %arg3[%c0_6, %c0_7] : memref<4x1xf32, #tpu.memory_space<vmem>>, vector<4x1xf32>
    %c0_8 = arith.constant 0 : index
    %c0_9 = arith.constant 0 : index
    %18 = vector.load %arg4[%c0_8, %c0_9] : memref<64x4xf32, #tpu.memory_space<vmem>>, vector<64x4xf32>
    %c0_10 = arith.constant 0 : index
    %c0_11 = arith.constant 0 : index
    %19 = vector.load %arg5[%c0_10, %c0_11] : memref<64x1xf32, #tpu.memory_space<vmem>>, vector<64x1xf32>
    %cst_12 = arith.constant dense<0.000000e+00> : vector<4x2xf32>
    %20 = tpu.matmul %16, %15, %cst_12 {dimension_numbers = #tpu.dot_dimension_numbers<[1], [0], [0], [1], [0, 0, 1, 1], [], []>} : vector<4x64xf32>, vector<64x2xf32>, vector<4x2xf32> -> vector<4x2xf32>
    %21 = vector.broadcast %17 : vector<4x1xf32> to vector<4x2xf32>
    %22 = arith.addf %20, %21 : vector<4x2xf32>
    %cst_13 = arith.constant 0.000000e+00 : f32
    %23 = vector.broadcast %cst_13 : f32 to vector<4x2xf32>
    %24 = arith.maximumf %22, %23 : vector<4x2xf32>
    %cst_14 = arith.constant dense<0.000000e+00> : vector<64x2xf32>
    %25 = tpu.matmul %18, %24, %cst_14 {dimension_numbers = #tpu.dot_dimension_numbers<[1], [0], [0], [1], [0, 0, 1, 1], [], []>} : vector<64x4xf32>, vector<4x2xf32>, vector<64x2xf32> -> vector<64x2xf32>
    %26 = vector.broadcast %19 : vector<64x1xf32> to vector<64x2xf32>
    %27 = arith.addf %25, %26 : vector<64x2xf32>
    %cst_15 = arith.constant dense<0.000000e+00> : vector<64xf32>
    %28 = vector.multi_reduction <add>, %27, %cst_15 [1] : vector<64x2xf32> to vector<64xf32>
    %29 = vector.shape_cast %28 : vector<64xf32> to vector<64x1xf32>
    %30 = arith.negf %29 : vector<64x1xf32>
    %31 = math.exp %30 : vector<64x1xf32>
    %cst_16 = arith.constant 1.000000e+00 : f32
    %32 = vector.broadcast %cst_16 : f32 to vector<64x1xf32>
    %33 = arith.addf %32, %31 : vector<64x1xf32>
    %34 = arith.divf %32, %33 : vector<64x1xf32>
    %35 = vector.broadcast %34 : vector<64x1xf32> to vector<64x256xf32>
    %36 = arith.mulf %1, %35 : vector<64x256xf32>
    %c0_17 = arith.constant 0 : index
    %c0_18 = arith.constant 0 : index
    %c0_19 = arith.constant 0 : index
    %37 = vector.load %arg6[%c0_17, %c0_18, %c0_19] : memref<1x64x256xf32, #tpu.memory_space<vmem>>, vector<1x64x256xf32>
    %38 = vector.shape_cast %37 : vector<1x64x256xf32> to vector<64x256xf32>
    %39 = vector.shape_cast %36 : vector<64x256xf32> to vector<1x64x256xf32>
    tpu.vector_store %arg6[%c0_17, %c0_18, %c0_19], %39 {strides = array<i32>} : memref<1x64x256xf32, #tpu.memory_space<vmem>>, vector<1x64x256xf32>,
    return
  }
  func.func @transform_0(%arg0: i32) -> (i32, i32, i32) {
    %c0_i32 = arith.constant 0 : i32
    %c0_i32_0 = arith.constant 0 : i32
    %c0_i32_1 = arith.constant 0 : i32
    return %arg0, %c0_i32, %c0_i32_0 : i32, i32, i32
  }
  func.func @transform_1(%arg0: i32) -> (i32, i32) {
    %c0_i32 = arith.constant 0 : i32
    %c0_i32_0 = arith.constant 0 : i32
    %c0_i32_1 = arith.constant 0 : i32
    return %c0_i32, %c0_i32_0 : i32, i32
  }
  func.func @transform_2(%arg0: i32) -> (i32, i32) {
    %c0_i32 = arith.constant 0 : i32
    %c0_i32_0 = arith.constant 0 : i32
    %c0_i32_1 = arith.constant 0 : i32
    return %c0_i32, %c0_i32_0 : i32, i32
  }
  func.func @transform_3(%arg0: i32) -> (i32, i32) {
    %c0_i32 = arith.constant 0 : i32
    %c0_i32_0 = arith.constant 0 : i32
    %c0_i32_1 = arith.constant 0 : i32
    return %c0_i32, %c0_i32_0 : i32, i32
  }
  func.func @transform_4(%arg0: i32) -> (i32, i32) {
    %c0_i32 = arith.constant 0 : i32
    %c0_i32_0 = arith.constant 0 : i32
    %c0_i32_1 = arith.constant 0 : i32
    return %c0_i32, %c0_i32_0 : i32, i32
  }
  func.func @transform_5(%arg0: i32) -> (i32, i32, i32) {
    %c0_i32 = arith.constant 0 : i32
    %c0_i32_0 = arith.constant 0 : i32
    %c0_i32_1 = arith.constant 0 : i32
    return %arg0, %c0_i32, %c0_i32_0 : i32, i32, i32
  }
}

</mosaic_0001>

<llo_original>
// kernel: channel_gate.1
$region0: #{channel_gate.1}
  #allocation0 [shape = 'u32[]', space=smem, size = 0x4, offset = 0x4, fixed_abs, tag = 'smem constant byte address 0x4 - core index']
  #allocation1 [shape = 'u32[144,128]{1,0:T(1,128)}', space=vmem, size = 0x12000, scoped, tag = 'internal scratch']
  %s0 = inlined_call_operand.vmem [shape: f32[2,64,256], index: 0, kind: input, shape index: {}]
  %s1 = inlined_call_operand.vmem [shape: f32[4,64], index: 1, kind: input, shape index: {}]
  %s2 = inlined_call_operand.vmem [shape: f32[4,1], index: 2, kind: input, shape index: {}]
  %s3 = inlined_call_operand.vmem [shape: f32[64,4], index: 3, kind: input, shape index: {}]
  %s4 = inlined_call_operand.vmem [shape: f32[64,1], index: 4, kind: input, shape index: {}]
  %s5 = inlined_call_operand.vmem [shape: f32[2,64,256], index: 5, kind: output, shape index: {}]
  %s6 = sld [smem:[#allocation0]]
  $region53: #{channel_gate.1} parent=0
    _
  %s8 = ssub.s32 1, %s6
  %s9 = scalar_select 0, %s8, %s6
  loop: start=0, step=1, limit=4
  $region2: #{channel_gate.1} parent=0 // loop_pre_header
    _
  $region3: #{channel_gate.1} parent=0 // loop_header
    %s11 = sphi 0, %s15
    %p12 = scmp.ge.s32.totalorder %s11, 4
    %s21 = sphi 0, %s23
    %s24 = sphi 0, %s21
    %s25 = sphi 0, %s24
    %s41 = sphi 0, %s25
    %s45 = sphi 0, %s45
    %s47 = sphi 0, %s45
    %s48 = sphi 0, %s47
    %s62 = sphi 0, %s48
    %s66 = sphi 0, %s66
    %s68 = sphi 0, %s66
    %s69 = sphi 0, %s68
    %s83 = sphi 0, %s69
    %s87 = sphi 0, %s87
    %s89 = sphi 0, %s87
    %s90 = sphi 0, %s89
    %s104 = sphi 0, %s90
    %s108 = sphi 0, %s108
    %s110 = sphi 0, %s108
    %s111 = sphi 0, %s110
    %s125 = sphi 0, %s111
    %s131 = sphi 0, %s133
    %s134 = sphi 0, %s131
    %s135 = sphi 0, %s134
    %s151 = sphi 0, %s135
  $region4: #{channel_gate.1} parent=0 // loop_header_branch
    %14 = sbr.rel (%p12) target = $region8
  $region5: #{channel_gate.1} parent=0 // loop_body
    %s16 = ssub.s32 %s11, 1
    %s17 = ssub.s32 %s11, 2
    %s18 = sadd.s32 %s11, 1
    %s19 = ssub.s32 %s11, %s18
    %p20 = scmp.eq.s32.totalorder %s19, 0
    %s22 = sadd.s32 %s21, 1
    %s23 = scalar_select %p20, %s21, %s22
    %p26 = pneg %p20
    %p27 = scmp.eq.s32.totalorder %s11, 1
    %p28 = por %p26, %p27
    %p29 = scmp.ne.s32.totalorder %s21, %s24
    %p30 = scmp.eq.s32.totalorder %s11, 0
    %p31 = por %p29, %p30
    %p32 = scmp.ne.s32.totalorder %s21, %s24
    %p33 = scmp.eq.s32.totalorder %s16, 1
    %p34 = por %p32, %p33
    %p35 = scmp.ne.s32.totalorder %s24, %s25
    %p36 = scmp.eq.s32.totalorder %s16, 0
    %p37 = por %p35, %p36
    %p38 = scmp.ne.s32.totalorder %s24, %s25
    %p39 = scmp.eq.s32.totalorder %s17, 1
    %p40 = por %p38, %p39
    %p42 = scmp.ne.s32.totalorder %s25, %s41
    %p43 = scmp.eq.s32.totalorder %s17, 0
    %p44 = por %p42, %p43
    %s46 = sadd.s32 %s45, 1
    %p49 = scmp.eq.s32.totalorder %s11, 1
    %p50 = scmp.ne.s32.totalorder %s45, %s47
    %p51 = scmp.eq.s32.totalorder %s11, 0
    %p52 = por %p50, %p51
    %p53 = scmp.ne.s32.totalorder %s45, %s47
    %p54 = scmp.eq.s32.totalorder %s16, 1
    %p55 = por %p53, %p54
    %p56 = scmp.ne.s32.totalorder %s47, %s48
    %p57 = scmp.eq.s32.totalorder %s16, 0
    %p58 = por %p56, %p57
    %p59 = scmp.ne.s32.totalorder %s47, %s48
    %p60 = scmp.eq.s32.totalorder %s17, 1
    %p61 = por %p59, %p60
    %p63 = scmp.ne.s32.totalorder %s48, %s62
    %p64 = scmp.eq.s32.totalorder %s17, 0
    %p65 = por %p63, %p64
    %s67 = sadd.s32 %s66, 1
    %p70 = scmp.eq.s32.totalorder %s11, 1
    %p71 = scmp.ne.s32.totalorder %s66, %s68
    %p72 = scmp.eq.s32.totalorder %s11, 0
    %p73 = por %p71, %p72
    %p74 = scmp.ne.s32.totalorder %s66, %s68
    %p75 = scmp.eq.s32.totalorder %s16, 1
    %p76 = por %p74, %p75
    %p77 = scmp.ne.s32.totalorder %s68, %s69
    %p78 = scmp.eq.s32.totalorder %s16, 0
    %p79 = por %p77, %p78
    %p80 = scmp.ne.s32.totalorder %s68, %s69
    %p81 = scmp.eq.s32.totalorder %s17, 1
    %p82 = por %p80, %p81
    %p84 = scmp.ne.s32.totalorder %s69, %s83
    %p85 = scmp.eq.s32.totalorder %s17, 0
    %p86 = por %p84, %p85
    %s88 = sadd.s32 %s87, 1
    %p91 = scmp.eq.s32.totalorder %s11, 1
    %p92 = scmp.ne.s32.totalorder %s87, %s89
    %p93 = scmp.eq.s32.totalorder %s11, 0
    %p94 = por %p92, %p93
    %p95 = scmp.ne.s32.totalorder %s87, %s89
    %p96 = scmp.eq.s32.totalorder %s16, 1
    %p97 = por %p95, %p96
    %p98 = scmp.ne.s32.totalorder %s89, %s90
    %p99 = scmp.eq.s32.totalorder %s16, 0
    %p100 = por %p98, %p99
    %p101 = scmp.ne.s32.totalorder %s89, %s90
    %p102 = scmp.eq.s32.totalorder %s17, 1
    %p103 = por %p101, %p102
    %p105 = scmp.ne.s32.totalorder %s90, %s104
    %p106 = scmp.eq.s32.totalorder %s17, 0
    %p107 = por %p105, %p106
    %s109 = sadd.s32 %s108, 1
    %p112 = scmp.eq.s32.totalorder %s11, 1
    %p113 = scmp.ne.s32.totalorder %s108, %s110
    %p114 = scmp.eq.s32.totalorder %s11, 0
    %p115 = por %p113, %p114
    %p116 = scmp.ne.s32.totalorder %s108, %s110
    %p117 = scmp.eq.s32.totalorder %s16, 1
    %p118 = por %p116, %p117
    %p119 = scmp.ne.s32.totalorder %s110, %s111
    %p120 = scmp.eq.s32.totalorder %s16, 0
    %p121 = por %p119, %p120
    %p122 = scmp.ne.s32.totalorder %s110, %s111
    %p123 = scmp.eq.s32.totalorder %s17, 1
    %p124 = por %p122, %p123
    %p126 = scmp.ne.s32.totalorder %s111, %s125
    %p127 = scmp.eq.s32.totalorder %s17, 0
    %p128 = por %p126, %p127
    %s129 = ssub.s32 %s11, %s18
    %p130 = scmp.eq.s32.totalorder %s129, 0
    %s132 = sadd.s32 %s131, 1
    %s133 = scalar_select %p130, %s131, %s132
    %p136 = pneg %p130
    %p137 = scmp.eq.s32.totalorder %s11, 1
    %p138 = por %p136, %p137
    %p139 = scmp.ne.s32.totalorder %s131, %s134
    %p140 = scmp.eq.s32.totalorder %s11, 0
    %p141 = por %p139, %p140
    %p142 = scmp.ne.s32.totalorder %s131, %s134
    %p143 = scmp.eq.s32.totalorder %s16, 1
    %p144 = por %p142, %p143
    %p145 = scmp.ne.s32.totalorder %s134, %s135
    %p146 = scmp.eq.s32.totalorder %s16, 0
    %p147 = por %p145, %p146
    %p148 = scmp.ne.s32.totalorder %s134, %s135
    %p149 = scmp.eq.s32.totalorder %s17, 1
    %p150 = por %p148, %p149
    %p152 = scmp.ne.s32.totalorder %s135, %s151
    %p153 = scmp.eq.s32.totalorder %s17, 0
    %p154 = por %p152, %p153
    %p155 = scmp.le.s32.totalorder 1, %s11
    %p156 = scmp.lt.s32.totalorder %s11, 3
    %p157 = pnand %p155, %p156
    %p158 = pneg %p157
    // Predicated region
    $region9: #{channel_gate.1} parent=5 // pred_check
      _
    $region10: #{channel_gate.1} parent=5 // pred_check_branch
      %160 = sbr.rel (%p157) target = $region12
    $region11: #{channel_gate.1} parent=5 // pred_region
      %s161 = ssub.s32 %s11, 1
      // Predicated region
      $region13: #{channel_gate.1} parent=11 // pred_check
        %p162 = pneg %p58
      $region14: #{channel_gate.1} parent=11 // pred_check_branch
        %164 = sbr.rel (%p162) target = $region16
      $region15: #{channel_gate.1} parent=11 // pred_region
        _
      $region16: #{channel_gate.1} parent=11 // pred_fallthru
        _
      // Predicated region
      $region17: #{channel_gate.1} parent=11 // pred_check
        %p165 = pneg %p79
      $region18: #{channel_gate.1} parent=11 // pred_check_branch
        %167 = sbr.rel (%p165) target = $region20
      $region19: #{channel_gate.1} parent=11 // pred_region
        _
      $region20: #{channel_gate.1} parent=11 // pred_fallthru
        _
      // Predicated region
      $region21: #{channel_gate.1} parent=11 // pred_check
        %p168 = pneg %p100
      $region22: #{channel_gate.1} parent=11 // pred_check_branch
        %170 = sbr.rel (%p168) target = $region24
      $region23: #{channel_gate.1} parent=11 // pred_region
        _
      $region24: #{channel_gate.1} parent=11 // pred_fallthru
        _
      // Predicated region
      $region25: #{channel_gate.1} parent=11 // pred_check
        %p171 = pneg %p121
      $region26: #{channel_gate.1} parent=11 // pred_check_branch
        %173 = sbr.rel (%p171) target = $region28
      $region27: #{channel_gate.1} parent=11 // pred_region
        _
      $region28: #{channel_gate.1} parent=11 // pred_fallthru
        _
    $region12: #{channel_gate.1} parent=5 // pred_fallthru
      _
    %p174 = scmp.lt.s32.totalorder %s11, 2
    // Predicated region
    $region29: #{channel_gate.1} parent=5 // pred_check
      %p175 = pneg %p174
    $region30: #{channel_gate.1} parent=5 // pred_check_branch
      %177 = sbr.rel (%p175) target = $region32
    $region31: #{channel_gate.1} parent=5 // pred_region
      // Predicated region
      $region33: #{channel_gate.1} parent=31 // pred_check
        %p178 = pneg %p31
      $region34: #{channel_gate.1} parent=31 // pred_check_branch
        %180 = sbr.rel (%p178) target = $region36
      $region35: #{channel_gate.1} parent=31 // pred_region
        %p181 = scmp.lt.s32.totalorder %s11, 1
        %s182 = scalar_select %p181, %s11, 1
        %s183 = smul.addr %s182, 16
        %s184 = smul.addr %s183, 8
        %s185 = scalar_lea.vmem %s0, %s184
      $region36: #{channel_gate.1} parent=31 // pred_fallthru
        _
    $region32: #{channel_gate.1} parent=5 // pred_fallthru
      _
    %p186 = scmp.le.s32.totalorder 1, %s11
    %p187 = scmp.lt.s32.totalorder %s11, 3
    %p188 = pnand %p186, %p187
    %p189 = pneg %p188
    // Predicated region
    $region37: #{channel_gate.1} parent=5 // pred_check
      _
    $region38: #{channel_gate.1} parent=5 // pred_check_branch
      %191 = sbr.rel (%p188) target = $region40
    $region39: #{channel_gate.1} parent=5 // pred_region
      %s192 = ssub.s32 %s11, 1
      %p193 = scmp.lt.s32.totalorder %s16, 1
      %s194 = scalar_select %p193, %s16, 1
      %s195 = smul.addr %s194, 16
      %s196 = smul.addr %s195, 8
      %s197 = scalar_lea.vmem %s0, %s196
      %p198 = pneg %p37
      %p199 = pneg %p34
      %p200 = pneg %p58
      %p201 = pneg %p55
      %p202 = pneg %p79
      %p203 = pneg %p76
      %p204 = pneg %p100
      %p205 = pneg %p97
      %p206 = pneg %p121
      %p207 = pneg %p118
      %p208 = pneg %p147
      %p209 = pneg %p144
      %p210 = scmp.lt.s32.totalorder %s16, 1
      %s211 = scalar_select %p210, %s16, 1
      %s212 = smul.addr %s211, 16
      %s213 = smul.addr %s212, 8
      %s214 = scalar_lea.vmem %s5, %s213
      %p215 = scmp.lt.s32.totalorder %s16, 1
      %s216 = scalar_select %p215, %s16, 1
      %s217 = smul.addr %s216, 16
      %s218 = smul.addr %s217, 8
      %s219 = scalar_lea.vmem %s0, %s218
      %p220 = scmp.lt.s32.totalorder %s16, 1
      %s221 = scalar_select %p220, %s16, 1
      %s222 = smul.addr %s221, 16
      %s223 = smul.addr %s222, 8
      %s224 = scalar_lea.vmem %s5, %s223
      %v225 = vld [vmem:[%s219] sm:$0xff]
      %v226 = vld [vmem:[%s219 + $0x8] sm:$0xff]
      %v227 = vld [vmem:[%s219 + $0x10] sm:$0xff]
      %v228 = vld [vmem:[%s219 + $0x18] sm:$0xff]
      %v229 = vld [vmem:[%s219 + $0x20] sm:$0xff]
      %v230 = vld [vmem:[%s219 + $0x28] sm:$0xff]
      %v231 = vld [vmem:[%s219 + $0x30] sm:$0xff]
      %v232 = vld [vmem:[%s219 + $0x38] sm:$0xff]
      %v233 = vld [vmem:[%s219 + $0x40] sm:$0xff]
      %v234 = vld [vmem:[%s219 + $0x48] sm:$0xff]
      %v235 = vld [vmem:[%s219 + $0x50] sm:$0xff]
      %v236 = vld [vmem:[%s219 + $0x58] sm:$0xff]
      %v237 = vld [vmem:[%s219 + $0x60] sm:$0xff]
      %v238 = vld [vmem:[%s219 + $0x68] sm:$0xff]
      %v239 = vld [vmem:[%s219 + $0x70] sm:$0xff]
      %v240 = vld [vmem:[%s219 + $0x78] sm:$0xff]
      %v241 = vmax.f32 %v225, %v226
      %242 = vmax.xlane.f32.xlu0 %v241
      %v243 = vpop.xlane.xlu0 %242
      %v244 = vmax.f32 %v227, %v228
      %245 = vmax.xlane.f32.xlu0 %v244
      %v246 = vpop.xlane.xlu0 %245
      %v247 = vmax.f32 %v229, %v230
      %248 = vmax.xlane.f32.xlu0 %v247
      %v249 = vpop.xlane.xlu0 %248
      %v250 = vmax.f32 %v231, %v232
      %251 = vmax.xlane.f32.xlu0 %v250
      %v252 = vpop.xlane.xlu0 %251
      %v253 = vmax.f32 %v233, %v234
      %254 = vmax.xlane.f32.xlu0 %v253
      %v255 = vpop.xlane.xlu0 %254
      %v256 = vmax.f32 %v235, %v236
      %257 = vmax.xlane.f32.xlu0 %v256
      %v258 = vpop.xlane.xlu0 %257
      %v259 = vmax.f32 %v237, %v238
      %260 = vmax.xlane.f32.xlu0 %v259
      %v261 = vpop.xlane.xlu0 %260
      %v262 = vmax.f32 %v239, %v240
      %263 = vmax.xlane.f32.xlu0 %v262
      %v264 = vpop.xlane.xlu0 %263
      %v265 = vadd.f32 %v225, %v226
      %266 = vadd.xlane.f32.xlu0 %v265
      %v267 = vpop.xlane.xlu0 %266
      %v268 = vadd.f32 %v227, %v228
      %269 = vadd.xlane.f32.xlu0 %v268
      %v270 = vpop.xlane.xlu0 %269
      %v271 = vadd.f32 %v229, %v230
      %272 = vadd.xlane.f32.xlu0 %v271
      %v273 = vpop.xlane.xlu0 %272
      %v274 = vadd.f32 %v231, %v232
      %275 = vadd.xlane.f32.xlu0 %v274
      %v276 = vpop.xlane.xlu0 %275
      %v277 = vadd.f32 %v233, %v234
      %278 = vadd.xlane.f32.xlu0 %v277
      %v279 = vpop.xlane.xlu0 %278
      %v280 = vadd.f32 %v235, %v236
      %281 = vadd.xlane.f32.xlu0 %v280
      %v282 = vpop.xlane.xlu0 %281
      %v283 = vadd.f32 %v237, %v238
      %284 = vadd.xlane.f32.xlu0 %v283
      %v285 = vpop.xlane.xlu0 %284
      %v286 = vadd.f32 %v239, %v240
      %287 = vadd.xlane.f32.xlu0 %v286
      %v288 = vpop.xlane.xlu0 %287
      %v289 = vmul.f32 %v267, 0.00390625
      %v290 = vmul.f32 %v270, 0.00390625
      %v291 = vmul.f32 %v273, 0.00390625
      %v292 = vmul.f32 %v276, 0.00390625
      %v293 = vmul.f32 %v279, 0.00390625
      %v294 = vmul.f32 %v282, 0.00390625
      %v295 = vmul.f32 %v285, 0.00390625
      %v296 = vmul.f32 %v288, 0.00390625
      %v297 = vlaneseq
      %v298 = vand.u32 %v297, 127
      %vm299 = vcmp.eq.s32.totalorder %v298, 0
      %v300 = vsel %vm299, %v289, %v243
      %v301 = vsel %vm299, %v290, %v246
      %v302 = vsel %vm299, %v291, %v249
      %v303 = vsel %vm299, %v292, %v252
      %v304 = vsel %vm299, %v293, %v255
      %v305 = vsel %vm299, %v294, %v258
      %v306 = vsel %vm299, %v295, %v261
      %v307 = vsel %vm299, %v296, %v264
      %v308 = vld [vmem:[%s1] sm:$0xf]
      %v309 = vld [vmem:[%s2] sm:$0xf]
      %v310 = vld [vmem:[%s3] sm:$0xff]
      %v311 = vld [vmem:[%s3 + $0x8] sm:$0xff]
      %v312 = vld [vmem:[%s3 + $0x10] sm:$0xff]
      %v313 = vld [vmem:[%s3 + $0x18] sm:$0xff]
      %v314 = vld [vmem:[%s3 + $0x20] sm:$0xff]
      %v315 = vld [vmem:[%s3 + $0x28] sm:$0xff]
      %v316 = vld [vmem:[%s3 + $0x30] sm:$0xff]
      %v317 = vld [vmem:[%s3 + $0x38] sm:$0xff]
      %v318 = vld [vmem:[%s4] sm:$0xff]
      %v319 = vld [vmem:[%s4 + $0x8] sm:$0xff]
      %v320 = vld [vmem:[%s4 + $0x10] sm:$0xff]
      %v321 = vld [vmem:[%s4 + $0x18] sm:$0xff]
      %v322 = vld [vmem:[%s4 + $0x20] sm:$0xff]
      %v323 = vld [vmem:[%s4 + $0x28] sm:$0xff]
      %v324 = vld [vmem:[%s4 + $0x30] sm:$0xff]
      %v325 = vld [vmem:[%s4 + $0x38] sm:$0xff]
      %327 = vset.pattern.permute.xlu0 0
      %328 = vperm.xlu0 %327, %v309
      %v329 = vpop.permute.xlu0 %328
      %vm331 = vcmask 523264
      %v333 = vsel %vm331, %v308, 0
      %335 = vmatprep.subr.mxu0 0.0
      %336 = vmatpush1.msra.mxu0 0.0
      %337 = vmatprep.subr.mxu0 0.0
      %338 = vmatpush1.msra.mxu0 0.0
      %339 = vmatprep.subr.mxu0 0.0
      %340 = vmatpush1.msra.mxu0 0.0
      %341 = vmatprep.subr.mxu0 0.0
      %342 = vmatpush1.msra.mxu0 0.0
      %343 = vmatprep.subr.mxu0 0.0
      %344 = vmatpush1.msra.mxu0 0.0
      %345 = vmatprep.subr.mxu0 0.0
      %346 = vmatpush1.msra.mxu0 0.0
      %347 = vmatprep.subr.mxu0 0.0
      %348 = vmatpush1.msra.mxu0 0.0
      %349 = vmatprep.subr.mxu0 0.0
      %350 = vmatpush1.msra.mxu0 0.0
      %351 = vmatprep.subr.mxu0 0.0
      %352 = vmatpush1.msra.mxu0 %v307
      %353 = vmatprep.subr.mxu0 0.0
      %354 = vmatpush1.msra.mxu0 %v306
      %355 = vmatprep.subr.mxu0 0.0
      %356 = vmatpush1.msra.mxu0 %v305
      %357 = vmatprep.subr.mxu0 0.0
      %358 = vmatpush1.msra.mxu0 %v304
      %359 = vmatprep.subr.mxu0 0.0
      %360 = vmatpush1.msra.mxu0 %v303
      %361 = vmatprep.subr.mxu0 0.0
      %362 = vmatpush1.msra.mxu0 %v302
      %363 = vmatprep.subr.mxu0 0.0
      %364 = vmatpush1.msra.mxu0 %v301
      %365 = vmatprep.subr.mxu0 0.0
      %366 = vmatpush1.msra.mxu0 %v300
      %367 = vmatprep.subr.mxu0 0.0
      %368 = vmatpush2.msra.mxu0 0.0
      %369 = vmatprep.subr.mxu0 0.0
      %370 = vmatpush2.msra.mxu0 0.0
      %371 = vmatprep.subr.mxu0 0.0
      %372 = vmatpush2.msra.mxu0 0.0
      %373 = vmatprep.subr.mxu0 0.0
      %374 = vmatpush2.msra.mxu0 0.0
      %375 = vmatprep.subr.mxu0 0.0
      %376 = vmatpush2.msra.mxu0 0.0
      %377 = vmatprep.subr.mxu0 0.0
      %378 = vmatpush2.msra.mxu0 0.0
      %379 = vmatprep.subr.mxu0 0.0
      %380 = vmatpush2.msra.mxu0 0.0
      %381 = vmatprep.subr.mxu0 0.0
      %382 = vmatpush2.msra.mxu0 0.0
      %383 = vmatprep.subr.mxu0 0.0
      %384 = vmatpush2.msra.mxu0 0.0
      %385 = vmatprep.subr.mxu0 0.0
      %386 = vmatpush2.msra.mxu0 0.0
      %387 = vmatprep.subr.mxu0 0.0
      %388 = vmatpush2.msra.mxu0 0.0
      %389 = vmatprep.subr.mxu0 0.0
      %390 = vmatpush2.msra.mxu0 0.0
      %391 = vmatprep.subr.mxu0 0.0
      %392 = vmatpush2.msra.mxu0 0.0
      %393 = vmatprep.subr.mxu0 0.0
      %394 = vmatpush2.msra.mxu0 0.0
      %395 = vmatprep.subr.mxu0 0.0
      %396 = vmatpush2.msra.mxu0 0.0
      %397 = vmatprep.subr.mxu0 0.0
      %398 = vmatpush2.msra.mxu0 0.0
      %399 = vmatprep.mubr.f32.mxu0 0.0
      %400 = vmatmul.mubr.f32.gmra.mxu0 %v333
      %v401 = vpop.f32.mrf.mxu0
      %v402 = vadd.f32 %v329, %v401
      %v403 = vpop.f32.mrf.mxu0
      %404 = vdwg.mxu0
      %v405 = vmax.f32 %v402, 0.0
      %407 = vset.pattern.permute.xlu0 0
      %408 = vperm.xlu0 %407, %v318
      %v409 = vpop.permute.xlu0 %408
      %412 = vset.pattern.permute.xlu0 0
      %413 = vperm.xlu0 %412, %v319
      %v414 = vpop.permute.xlu0 %413
      %417 = vset.pattern.permute.xlu0 0
      %418 = vperm.xlu0 %417, %v320
      %v419 = vpop.permute.xlu0 %418
      %422 = vset.pattern.permute.xlu0 0
      %423 = vperm.xlu0 %422, %v321
      %v424 = vpop.permute.xlu0 %423
      %427 = vset.pattern.permute.xlu0 0
      %428 = vperm.xlu0 %427, %v322
      %v429 = vpop.permute.xlu0 %428
      %432 = vset.pattern.permute.xlu0 0
      %433 = vperm.xlu0 %432, %v323
      %v434 = vpop.permute.xlu0 %433
      %437 = vset.pattern.permute.xlu0 0
      %438 = vperm.xlu0 %437, %v324
      %v439 = vpop.permute.xlu0 %438
      %442 = vset.pattern.permute.xlu0 0
      %443 = vperm.xlu0 %442, %v325
      %v444 = vpop.permute.xlu0 %443
      %vm446 = vcmask 31744
      %v448 = vsel %vm446, %v310, 0
      %v451 = vsel %vm446, %v311, 0
      %v454 = vsel %vm446, %v312, 0
      %v457 = vsel %vm446, %v313, 0
      %v460 = vsel %vm446, %v314, 0
      %v463 = vsel %vm446, %v315, 0
      %v466 = vsel %vm446, %v316, 0
      %v469 = vsel %vm446, %v317, 0
      %vm471 = vcmask 1043456
      %v473 = vsel %vm471, %v405, 0
      %475 = vmatprep.subr.mxu0 0.0
      %476 = vmatpush1.msra.mxu0 0.0
      %477 = vmatprep.subr.mxu0 0.0
      %478 = vmatpush1.msra.mxu0 0.0
      %479 = vmatprep.subr.mxu0 0.0
      %480 = vmatpush1.msra.mxu0 0.0
      %481 = vmatprep.subr.mxu0 0.0
      %482 = vmatpush1.msra.mxu0 0.0
      %483 = vmatprep.subr.mxu0 0.0
      %484 = vmatpush1.msra.mxu0 0.0
      %485 = vmatprep.subr.mxu0 0.0
      %486 = vmatpush1.msra.mxu0 0.0
      %487 = vmatprep.subr.mxu0 0.0
      %488 = vmatpush1.msra.mxu0 0.0
      %489 = vmatprep.subr.mxu0 0.0
      %490 = vmatpush1.msra.mxu0 0.0
      %491 = vmatprep.subr.mxu0 0.0
      %492 = vmatpush1.msra.mxu0 0.0
      %493 = vmatprep.subr.mxu0 0.0
      %494 = vmatpush1.msra.mxu0 0.0
      %495 = vmatprep.subr.mxu0 0.0
      %496 = vmatpush1.msra.mxu0 0.0
      %497 = vmatprep.subr.mxu0 0.0
      %498 = vmatpush1.msra.mxu0 0.0
      %499 = vmatprep.subr.mxu0 0.0
      %500 = vmatpush1.msra.mxu0 0.0
      %501 = vmatprep.subr.mxu0 0.0
      %502 = vmatpush1.msra.mxu0 0.0
      %503 = vmatprep.subr.mxu0 0.0
      %504 = vmatpush1.msra.mxu0 0.0
      %505 = vmatprep.subr.mxu0 0.0
      %506 = vmatpush1.msra.mxu0 %v473
      %507 = vmatprep.subr.mxu0 0.0
      %508 = vmatpush2.msra.mxu0 0.0
      %509 = vmatprep.subr.mxu0 0.0
      %510 = vmatpush2.msra.mxu0 0.0
      %511 = vmatprep.subr.mxu0 0.0
      %512 = vmatpush2.msra.mxu0 0.0
      %513 = vmatprep.subr.mxu0 0.0
      %514 = vmatpush2.msra.mxu0 0.0
      %515 = vmatprep.subr.mxu0 0.0
      %516 = vmatpush2.msra.mxu0 0.0
      %517 = vmatprep.subr.mxu0 0.0
      %518 = vmatpush2.msra.mxu0 0.0
      %519 = vmatprep.subr.mxu0 0.0
      %520 = vmatpush2.msra.mxu0 0.0
      %521 = vmatprep.subr.mxu0 0.0
      %522 = vmatpush2.msra.mxu0 0.0
      %523 = vmatprep.subr.mxu0 0.0
      %524 = vmatpush2.msra.mxu0 0.0
      %525 = vmatprep.subr.mxu0 0.0
      %526 = vmatpush2.msra.mxu0 0.0
      %527 = vmatprep.subr.mxu0 0.0
      %528 = vmatpush2.msra.mxu0 0.0
      %529 = vmatprep.subr.mxu0 0.0
      %530 = vmatpush2.msra.mxu0 0.0
      %531 = vmatprep.subr.mxu0 0.0
      %532 = vmatpush2.msra.mxu0 0.0
      %533 = vmatprep.subr.mxu0 0.0
      %534 = vmatpush2.msra.mxu0 0.0
      %535 = vmatprep.subr.mxu0 0.0
      %536 = vmatpush2.msra.mxu0 0.0
      %537 = vmatprep.subr.mxu0 0.0
      %538 = vmatpush2.msra.mxu0 0.0
      %539 = vmatprep.mubr.f32.mxu0 0.0
      %540 = vmatmul.mubr.f32.gmra.mxu0 %v448
      %v541 = vpop.f32.mrf.mxu0
      %v542 = vadd.f32 %v409, %v541
      %v543 = vpop.f32.mrf.mxu0
      %544 = vmatprep.mubr.f32.mxu0 0.0
      %545 = vmatmul.mubr.f32.gmra.mxu0 %v451
      %v546 = vpop.f32.mrf.mxu0
      %v547 = vadd.f32 %v414, %v546
      %v548 = vpop.f32.mrf.mxu0
      %549 = vmatprep.mubr.f32.mxu0 0.0
      %550 = vmatmul.mubr.f32.gmra.mxu0 %v454
      %v551 = vpop.f32.mrf.mxu0
      %v552 = vadd.f32 %v419, %v551
      %v553 = vpop.f32.mrf.mxu0
      %554 = vmatprep.mubr.f32.mxu0 0.0
      %555 = vmatmul.mubr.f32.gmra.mxu0 %v457
      %v556 = vpop.f32.mrf.mxu0
      %v557 = vadd.f32 %v424, %v556
      %v558 = vpop.f32.mrf.mxu0
      %559 = vmatprep.mubr.f32.mxu0 0.0
      %560 = vmatmul.mubr.f32.gmra.mxu0 %v460
      %v561 = vpop.f32.mrf.mxu0
      %v562 = vadd.f32 %v429, %v561
      %v563 = vpop.f32.mrf.mxu0
      %564 = vmatprep.mubr.f32.mxu0 0.0
      %565 = vmatmul.mubr.f32.gmra.mxu0 %v463
      %v566 = vpop.f32.mrf.mxu0
      %v567 = vadd.f32 %v434, %v566
      %v568 = vpop.f32.mrf.mxu0
      %569 = vmatprep.mubr.f32.mxu0 0.0
      %570 = vmatmul.mubr.f32.gmra.mxu0 %v466
      %v571 = vpop.f32.mrf.mxu0
      %v572 = vadd.f32 %v439, %v571
      %v573 = vpop.f32.mrf.mxu0
      %574 = vmatprep.mubr.f32.mxu0 0.0
      %575 = vmatmul.mubr.f32.gmra.mxu0 %v469
      %v576 = vpop.f32.mrf.mxu0
      %v577 = vadd.f32 %v444, %v576
      %v578 = vpop.f32.mrf.mxu0
      %579 = vdwg.mxu0
      %vm580 = vcmask 15360
      %v581 = vsel %vm580, %v542, 0.0
      %582 = vadd.xlane.f32.xlu0 %v581
      %v583 = vpop.xlane.xlu0 %582
      %v584 = vsel %vm580, %v547, 0.0
      %585 = vadd.xlane.f32.xlu0 %v584
      %v586 = vpop.xlane.xlu0 %585
      %v587 = vsel %vm580, %v552, 0.0
      %588 = vadd.xlane.f32.xlu0 %v587
      %v589 = vpop.xlane.xlu0 %588
      %v590 = vsel %vm580, %v557, 0.0
      %591 = vadd.xlane.f32.xlu0 %v590
      %v592 = vpop.xlane.xlu0 %591
      %v593 = vsel %vm580, %v562, 0.0
      %594 = vadd.xlane.f32.xlu0 %v593
      %v595 = vpop.xlane.xlu0 %594
      %v596 = vsel %vm580, %v567, 0.0
      %597 = vadd.xlane.f32.xlu0 %v596
      %v598 = vpop.xlane.xlu0 %597
      %v599 = vsel %vm580, %v572, 0.0
      %600 = vadd.xlane.f32.xlu0 %v599
      %v601 = vpop.xlane.xlu0 %600
      %v602 = vsel %vm580, %v577, 0.0
      %603 = vadd.xlane.f32.xlu0 %v602
      %v604 = vpop.xlane.xlu0 %603
      %v605 = vxor.u32 %v583, 2147483648
      %v606 = vxor.u32 %v586, 2147483648
      %v607 = vxor.u32 %v589, 2147483648
      %v608 = vxor.u32 %v592, 2147483648
      %v609 = vxor.u32 %v595, 2147483648
      %v610 = vxor.u32 %v598, 2147483648
      %v611 = vxor.u32 %v601, 2147483648
      %v612 = vxor.u32 %v604, 2147483648
      %v613 = vmul.f32 %v605, 1.442695
      %v614 = vpow.pop %v613
      %v615 = vmul.f32 %v606, 1.442695
      %v616 = vpow.pop %v615
      %v617 = vmul.f32 %v607, 1.442695
      %v618 = vpow.pop %v617
      %v619 = vmul.f32 %v608, 1.442695
      %v620 = vpow.pop %v619
      %v621 = vmul.f32 %v609, 1.442695
      %v622 = vpow.pop %v621
      %v623 = vmul.f32 %v610, 1.442695
      %v624 = vpow.pop %v623
      %v625 = vmul.f32 %v611, 1.442695
      %v626 = vpow.pop %v625
      %v627 = vmul.f32 %v612, 1.442695
      %v628 = vpow.pop %v627
      %v629 = vadd.f32 %v614, 1.0
      %v630 = vadd.f32 %v616, 1.0
      %v631 = vadd.f32 %v618, 1.0
      %v632 = vadd.f32 %v620, 1.0
      %v633 = vadd.f32 %v622, 1.0
      %v634 = vadd.f32 %v624, 1.0
      %v635 = vadd.f32 %v626, 1.0
      %v636 = vadd.f32 %v628, 1.0
      %v637 = vrcp.pop %v629
      %v638 = vmul.f32 1.0, %v637
      %v639 = vrcp.pop %v630
      %v640 = vmul.f32 1.0, %v639
      %v641 = vrcp.pop %v631
      %v642 = vmul.f32 1.0, %v641
      %v643 = vrcp.pop %v632
      %v644 = vmul.f32 1.0, %v643
      %v645 = vrcp.pop %v633
      %v646 = vmul.f32 1.0, %v645
      %v647 = vrcp.pop %v634
      %v648 = vmul.f32 1.0, %v647
      %v649 = vrcp.pop %v635
      %v650 = vmul.f32 1.0, %v649
      %v651 = vrcp.pop %v636
      %v652 = vmul.f32 1.0, %v651
      %v653 = vmul.f32 %v225, %v638
      %v654 = vmul.f32 %v226, %v638
      %v655 = vmul.f32 %v227, %v640
      %v656 = vmul.f32 %v228, %v640
      %v657 = vmul.f32 %v229, %v642
      %v658 = vmul.f32 %v230, %v642
      %v659 = vmul.f32 %v231, %v644
      %v660 = vmul.f32 %v232, %v644
      %v661 = vmul.f32 %v233, %v646
      %v662 = vmul.f32 %v234, %v646
      %v663 = vmul.f32 %v235, %v648
      %v664 = vmul.f32 %v236, %v648
      %v665 = vmul.f32 %v237, %v650
      %v666 = vmul.f32 %v238, %v650
      %v667 = vmul.f32 %v239, %v652
      %v668 = vmul.f32 %v240, %v652
      %669 = vst [vmem:[%s224] sm:$0xff] %v653
      %670 = vst [vmem:[%s224 + $0x8] sm:$0xff] %v654
      %671 = vst [vmem:[%s224 + $0x10] sm:$0xff] %v655
      %672 = vst [vmem:[%s224 + $0x18] sm:$0xff] %v656
      %673 = vst [vmem:[%s224 + $0x20] sm:$0xff] %v657
      %674 = vst [vmem:[%s224 + $0x28] sm:$0xff] %v658
      %675 = vst [vmem:[%s224 + $0x30] sm:$0xff] %v659
      %676 = vst [vmem:[%s224 + $0x38] sm:$0xff] %v660
      %677 = vst [vmem:[%s224 + $0x40] sm:$0xff] %v661
      %678 = vst [vmem:[%s224 + $0x48] sm:$0xff] %v662
      %679 = vst [vmem:[%s224 + $0x50] sm:$0xff] %v663
      %680 = vst [vmem:[%s224 + $0x58] sm:$0xff] %v664
      %681 = vst [vmem:[%s224 + $0x60] sm:$0xff] %v665
      %682 = vst [vmem:[%s224 + $0x68] sm:$0xff] %v666
      %683 = vst [vmem:[%s224 + $0x70] sm:$0xff] %v667
      %684 = vst [vmem:[%s224 + $0x78] sm:$0xff] %v668
      %p685 = scmp.lt.s32.totalorder %s16, 1
      %s686 = scalar_select %p685, %s16, 1
      %s687 = smul.addr %s686, 16
      %s688 = smul.addr %s687, 8
      %s689 = scalar_lea.vmem %s5, %s688
      // Predicated region
      $region41: #{channel_gate.1} parent=39 // pred_check
        %p690 = pneg %p144
      $region42: #{channel_gate.1} parent=39 // pred_check_branch
        %692 = sbr.rel (%p690) target = $region44
      $region43: #{channel_gate.1} parent=39 // pred_region
        _
      $region44: #{channel_gate.1} parent=39 // pred_fallthru
        _
    $region40: #{channel_gate.1} parent=5 // pred_fallthru
      _
    %p693 = scmp.le.s32.totalorder 2, %s11
    // Predicated region
    $region45: #{channel_gate.1} parent=5 // pred_check
      %p694 = pneg %p693
    $region46: #{channel_gate.1} parent=5 // pred_check_branch
      %696 = sbr.rel (%p694) target = $region48
    $region47: #{channel_gate.1} parent=5 // pred_region
      %s697 = ssub.s32 %s11, 2
      // Predicated region
      $region49: #{channel_gate.1} parent=47 // pred_check
        %p698 = pneg %p150
      $region50: #{channel_gate.1} parent=47 // pred_check_branch
        %700 = sbr.rel (%p698) target = $region52
      $region51: #{channel_gate.1} parent=47 // pred_region
        %p701 = scmp.lt.s32.totalorder %s17, 1
        %s702 = scalar_select %p701, %s17, 1
        %s703 = smul.addr %s702, 16
        %s704 = smul.addr %s703, 8
        %s705 = scalar_lea.vmem %s5, %s704
      $region52: #{channel_gate.1} parent=47 // pred_fallthru
        _
    $region48: #{channel_gate.1} parent=5 // pred_fallthru
      _
  $region6: #{channel_gate.1} parent=0 // loop_footer
    %s15 = sadd.s32 1, %s11
  $region7: #{channel_gate.1} parent=0 // loop_footer_branch
    %10 = sbr.rel target = $region3
  $region8: #{channel_gate.1} parent=0 // loop_exit
    _

</llo_original>
